<compile_context>
chip_gen: v7x
topology: tpu7x:2x2x1
jax: 0.10.0
libtpu: 0.0.40
codegen_flags: <defaults>
</compile_context>

<pallas_src>
import functools

import jax
import jax.numpy as jnp
from jax import lax
from jax.experimental import pallas as pl
from jax.experimental.pallas import tpu as pltpu

LANES = 128
SUBLANES = 8


def _focal_loss_kernel(x_ref, t_ref, out_ref, *, gamma, gamma_int,
                       binary_targets, approx_reciprocal,
                       valid_rows_last, need_row_mask):
    x = x_ref[...].astype(jnp.float32)
    t = t_ref[...].astype(jnp.float32)

    # Stable BCE-with-logits (identical to the PyTorch formulation):
    #   x - x*t + max(-x,0) + log(exp(-max) + exp(-x-max))
    #   == x*(1-t) + max(-x,0) + log1p(exp(-|x|))
    ex = jnp.exp(-jnp.abs(x))
    loss = x * (1.0 - t) + jnp.maximum(-x, 0.0) + jnp.log1p(ex)

    # Focal weight sigmoid(z)^gamma with z = -x*(2t-1) = x*(1-2t).
    z = x * (1.0 - 2.0 * t)
    if binary_targets:
        ez = ex                       # hard 0/1 labels => |z| == |x|: reuse exp
    else:
        ez = jnp.exp(-jnp.abs(z))     # soft labels need their own exp

    if gamma_int is not None:
        if gamma_int == 0:
            w = jnp.ones_like(loss)
        else:
            denom = 1.0 + ez
            if approx_reciprocal:
                inv = pl.reciprocal(denom, approx=True)   # EUP slot, ~free
            else:
                inv = 1.0 / denom
            s = jnp.where(z >= 0.0, inv, ez * inv)        # sigmoid(z), stable
            w = s
            for _ in range(gamma_int - 1):                # integer power
                w = w * s
    else:
        # General gamma: exact exp(gamma * logsigmoid(z)).
        logsig = jnp.minimum(z, 0.0) - jnp.log1p(ez)
        w = jnp.exp(gamma * logsig)

    loss = w * loss

    # Lane-dense (8, 128) output block carrying this tile's partial sum at [0,0].
    pos00 = ((lax.broadcasted_iota(jnp.int32, (SUBLANES, LANES), 0) == 0)
             & (lax.broadcasted_iota(jnp.int32, (SUBLANES, LANES), 1) == 0))

    if need_row_mask:
        i = pl.program_id(0)
        last = pl.num_programs(0) - 1

        @pl.when(i != last)
        def _():
            out_ref[...] = jnp.where(pos00, jnp.sum(loss), 0.0)

        @pl.when(i == last)
        def _():
            # Only the final tile pays for the mask (tile-local row compare).
            row = lax.broadcasted_iota(jnp.int32, loss.shape, 0)
            masked = jnp.where(row < valid_rows_last, loss, 0.0)
            out_ref[...] = jnp.where(pos00, jnp.sum(masked), 0.0)
    else:
        out_ref[...] = jnp.where(pos00, jnp.sum(loss), 0.0)


def _row_alignment(*dtypes):
    """Row-block granularity that stays layout-friendly for packed dtypes."""
    a = SUBLANES
    for dt in dtypes:
        a = max(a, SUBLANES * max(1, 4 // jnp.dtype(dt).itemsize))
    return a


def focal_loss(logit, target, gamma=2.0, *,
               binary_targets=False,
               approx_reciprocal=True,
               block_bytes=4 * 1024 * 1024,
               vmem_limit_bytes=32 * 1024 * 1024):
    """Equivalent of FocalLoss(gamma).forward(logit, target) (forward only)."""
    assert logit.shape == target.shape
    n_valid = int(logit.size)
    # PyTorch: if 2-D -> loss.sum(dim=1).mean() == total / N_rows; else loss.mean().
    divisor = logit.shape[0] if logit.ndim == 2 else n_valid

    gamma = float(gamma)
    gamma_int = int(gamma) if (gamma.is_integer() and 0.0 <= gamma <= 16.0) else None

    # PyTorch does target.float(); 0/1 int / bool labels -> bf16 (lossless, and
    # halves the streamed bytes vs f32).  Float targets are streamed as-is.
    if not jnp.issubdtype(target.dtype, jnp.floating):
        target = target.astype(jnp.bfloat16)

    # Choose a 2-D view with NO data movement (reshape of contiguous is free).
    if n_valid % LANES == 0:
        x2 = logit.reshape(-1, LANES)          # fully lane-dense
        t2 = target.reshape(-1, LANES)
    elif logit.ndim >= 2:
        x2 = logit.reshape(-1, logit.shape[-1])    # natural trailing dim
        t2 = target.reshape(-1, target.shape[-1])
    else:
        # TODO(synk): a huge ragged 1-D input becomes one (1, n) block; fine for
        # loss-sized inputs, would need column chunking for >VMEM sizes.
        x2 = logit.reshape(1, -1)
        t2 = target.reshape(1, -1)

    rows, cols = x2.shape
    align = _row_alignment(x2.dtype, t2.dtype)

    bytes_per_row = cols * (x2.dtype.itemsize + t2.dtype.itemsize)
    tile_rows = max(align, (block_bytes // max(1, bytes_per_row)) // align * align)
    # Guarantee >= 2 grid steps when possible so the "parallel" axis can shard
    # across both TensorCores on v7x.
    if rows >= 2 * align:
        half = pl.cdiv(pl.cdiv(rows, 2), align) * align
        tile_rows = min(tile_rows, half)
    if tile_rows >= rows:
        tile_rows = rows                         # single block == full array dims

    num_tiles = pl.cdiv(rows, tile_rows)
    valid_rows_last = rows - (num_tiles - 1) * tile_rows
    need_row_mask = valid_rows_last != tile_rows

    kernel = functools.partial(
        _focal_loss_kernel,
        gamma=gamma,
        gamma_int=gamma_int,
        binary_targets=bool(binary_targets),
        approx_reciprocal=bool(approx_reciprocal),
        valid_rows_last=valid_rows_last,
        need_row_mask=need_row_mask,
    )

    out_rows = num_tiles * SUBLANES
    n_trans = (2 if binary_targets else 3) + 1
    cost = pl.CostEstimate(
        flops=16 * n_valid,
        transcendentals=n_trans * n_valid,
        bytes_accessed=(x2.size * x2.dtype.itemsize
                        + t2.size * t2.dtype.itemsize
                        + out_rows * LANES * 4),
    )

    partials = pl.pallas_call(
        kernel,
        out_shape=jax.ShapeDtypeStruct((out_rows, LANES), jnp.float32),
        grid_spec=pltpu.PrefetchScalarGridSpec(
            num_scalar_prefetch=0,
            grid=(num_tiles,),
            in_specs=[
                pl.BlockSpec((tile_rows, cols), lambda i: (i, 0)),
                pl.BlockSpec((tile_rows, cols), lambda i: (i, 0)),
            ],
            out_specs=pl.BlockSpec((SUBLANES, LANES), lambda i: (i, 0)),
        ),
        compiler_params=pltpu.CompilerParams(
            dimension_semantics=("parallel",),
            vmem_limit_bytes=int(vmem_limit_bytes),
        ),
        cost_estimate=cost,
    )(x2, t2)

    # loss.sum(dim=1).mean() == total_sum / divisor  (tiny f32 reduction in XLA).
    return jnp.sum(partials) / jnp.float32(divisor)


def _focal_loss_ref(logit, target, gamma=2.0):
    """Pure-JAX transcription of the PyTorch FocalLoss.forward."""
    x = logit.astype(jnp.float32)
    t = target.astype(jnp.float32)
    max_val = jnp.maximum(-x, 0.0)
    loss = x - x * t + max_val + jnp.log(jnp.exp(-max_val) + jnp.exp(-x - max_val))
    invprobs = jax.nn.log_sigmoid(-x * (t * 2.0 - 1.0))
    loss = jnp.exp(invprobs * gamma) * loss
    if loss.ndim == 2:
        loss = loss.sum(axis=1)
    return loss.mean()


if __name__ == "__main__":
    key = jax.random.PRNGKey(0)
    k1, k2, k3, k4, k5, k6 = jax.random.split(key, 6)

    # Case 1: (batch, classes) = (16, 32), hard 0/1 labels streamed as bf16.
    logit1 = jax.random.normal(k1, (16, 32), dtype=jnp.float32) * 2.0
    target1 = (jax.random.uniform(k2, (16, 32)) > 0.5).astype(jnp.bfloat16)
    out1 = jax.block_until_ready(
        focal_loss(logit1, target1, gamma=2.0, binary_targets=True))
    ref1 = _focal_loss_ref(logit1, target1, gamma=2.0)
    assert jnp.allclose(out1, ref1, rtol=1e-3, atol=1e-3), (out1, ref1)

    # Case 1b: same data, exact divide instead of approx EUP reciprocal.
    out1b = jax.block_until_ready(
        focal_loss(logit1, target1, gamma=2.0, binary_targets=True,
                   approx_reciprocal=False))
    assert jnp.allclose(out1b, ref1, rtol=1e-4, atol=1e-5), (out1b, ref1)

    # Case 2: odd trailing dim (6, 50) -> ragged / natural (N, C) blocking path.
    logit2 = jax.random.normal(k3, (6, 50), dtype=jnp.float32) * 3.0
    target2 = (jax.random.uniform(k4, (6, 50)) > 0.5).astype(jnp.bfloat16)
    out2 = jax.block_until_ready(
        focal_loss(logit2, target2, gamma=2.0, binary_targets=True))
    ref2 = _focal_loss_ref(logit2, target2, gamma=2.0)
    assert jnp.allclose(out2, ref2, rtol=1e-3, atol=1e-3), (out2, ref2)

    # Case 3: soft labels, multi-tile grid with a partial (masked) last block.
    logit3 = jax.random.normal(k5, (40, 128), dtype=jnp.float32) * 2.0
    target3 = jax.random.uniform(k6, (40, 128), dtype=jnp.float32)
    out3 = jax.block_until_ready(
        focal_loss(logit3, target3, gamma=2.0, binary_targets=False))
    ref3 = _focal_loss_ref(logit3, target3, gamma=2.0)
    assert jnp.allclose(out3, ref3, rtol=1e-3, atol=1e-3), (out3, ref3)

    # Case 4: non-integer gamma (general exp(gamma * logsigmoid) path).
    out4 = jax.block_until_ready(
        focal_loss(logit1, target1, gamma=1.5, binary_targets=True))
    ref4 = _focal_loss_ref(logit1, target1, gamma=1.5)
    assert jnp.allclose(out4, ref4, rtol=1e-3, atol=1e-3), (out4, ref4)

    print("KERNEL_OK")
</pallas_src>

<mosaic_0001>
module attributes {stable_mosaic.version = 11 : i64} {
  func.func @_focal_loss_kernel(%arg0: i32, %arg1: memref<4x128xf32, #tpu.memory_space<vmem>>, %arg2: memref<4x128xbf16, #tpu.memory_space<vmem>>, %arg3: memref<8x128xf32, #tpu.memory_space<vmem>>) attributes {dimension_semantics = [#tpu.dimension_semantics<parallel>], iteration_bounds = array<i64: 1>, scalar_prefetch = 0 : i64, scratch_operands = 0 : i64, tpu.core_type = #tpu.core_type<tc>, window_params = [{transform_indices = @transform_0, window_bounds = array<i64: 4, 128>}, {transform_indices = @transform_1, window_bounds = array<i64: 4, 128>}, {transform_indices = @transform_2, window_bounds = array<i64: 8, 128>}]} {
    %c0 = arith.constant 0 : index
    %c0_0 = arith.constant 0 : index
    %0 = vector.load %arg1[%c0, %c0_0] : memref<4x128xf32, #tpu.memory_space<vmem>>, vector<4x128xf32>
    %c0_1 = arith.constant 0 : index
    %c0_2 = arith.constant 0 : index
    %1 = vector.load %arg2[%c0_1, %c0_2] : memref<4x128xbf16, #tpu.memory_space<vmem>>, vector<4x128xbf16>
    %2 = arith.extf %1 : vector<4x128xbf16> to vector<4x128xf32>
    %3 = math.absf %0 : vector<4x128xf32>
    %cst = arith.constant 0.000000e+00 : f32
    %4 = vector.broadcast %cst : f32 to vector<4x128xf32>
    %5 = arith.subf %4, %3 : vector<4x128xf32>
    %6 = math.exp %5 : vector<4x128xf32>
    %cst_3 = arith.constant 1.000000e+00 : f32
    %7 = vector.broadcast %cst_3 : f32 to vector<4x128xf32>
    %8 = arith.subf %7, %2 : vector<4x128xf32>
    %9 = arith.mulf %0, %8 : vector<4x128xf32>
    %cst_4 = arith.constant 0.000000e+00 : f32
    %10 = vector.broadcast %cst_4 : f32 to vector<4x128xf32>
    %11 = arith.subf %10, %0 : vector<4x128xf32>
    %cst_5 = arith.constant 0.000000e+00 : f32
    %12 = vector.broadcast %cst_5 : f32 to vector<4x128xf32>
    %13 = arith.maximumf %11, %12 : vector<4x128xf32>
    %14 = arith.addf %9, %13 : vector<4x128xf32>
    %15 = math.log1p %6 : vector<4x128xf32>
    %16 = arith.addf %14, %15 : vector<4x128xf32>
    %cst_6 = arith.constant 2.000000e+00 : f32
    %17 = vector.broadcast %cst_6 : f32 to vector<4x128xf32>
    %18 = arith.mulf %17, %2 : vector<4x128xf32>
    %cst_7 = arith.constant 1.000000e+00 : f32
    %19 = vector.broadcast %cst_7 : f32 to vector<4x128xf32>
    %20 = arith.subf %19, %18 : vector<4x128xf32>
    %21 = arith.mulf %0, %20 : vector<4x128xf32>
    %cst_8 = arith.constant 1.000000e+00 : f32
    %22 = vector.broadcast %cst_8 : f32 to vector<4x128xf32>
    %23 = arith.addf %22, %6 : vector<4x128xf32>
    %24 = tpu.reciprocal %23 {approx = true} : vector<4x128xf32> -> vector<4x128xf32>
    %cst_9 = arith.constant 0.000000e+00 : f32
    %25 = vector.broadcast %cst_9 : f32 to vector<4x128xf32>
    %26 = arith.cmpf oge, %21, %25 : vector<4x128xf32>
    %27 = arith.mulf %6, %24 : vector<4x128xf32>
    %28 = arith.select %26, %24, %27 : vector<4x128xi1>, vector<4x128xf32>
    %29 = arith.mulf %28, %28 : vector<4x128xf32>
    %30 = arith.mulf %29, %16 : vector<4x128xf32>
    %31 = tpu.iota {dimensions = array<i32: 0>} : vector<8x128xi32>
    %c0_i32 = arith.constant 0 : i32
    %32 = vector.broadcast %c0_i32 : i32 to vector<8x128xi32>
    %33 = arith.cmpi eq, %31, %32 : vector<8x128xi32>
    %34 = tpu.iota {dimensions = array<i32: 1>} : vector<8x128xi32>
    %c0_i32_10 = arith.constant 0 : i32
    %35 = vector.broadcast %c0_i32_10 : i32 to vector<8x128xi32>
    %36 = arith.cmpi eq, %34, %35 : vector<8x128xi32>
    %37 = arith.andi %33, %36 : vector<8x128xi1>
    %38 = vector.shape_cast %30 : vector<4x128xf32> to vector<1x4x128xf32>
    %cst_11 = arith.constant dense<0.000000e+00> : vector<1xf32>
    %39 = vector.multi_reduction <add>, %38, %cst_11 [1, 2] : vector<1x4x128xf32> to vector<1xf32>
    %40 = vector.shape_cast %39 : vector<1xf32> to vector<1x1x1xf32>
    %41 = vector.extract %40[0, 0, 0] : f32 from vector<1x1x1xf32>
    %cst_12 = arith.constant 0.000000e+00 : f32
    %42 = vector.broadcast %41 : f32 to vector<8x128xf32>
    %43 = vector.broadcast %cst_12 : f32 to vector<8x128xf32>
    %44 = arith.select %37, %42, %43 : vector<8x128xi1>, vector<8x128xf32>
    %c0_13 = arith.constant 0 : index
    %c0_14 = arith.constant 0 : index
    %45 = vector.load %arg3[%c0_13, %c0_14] : memref<8x128xf32, #tpu.memory_space<vmem>>, vector<8x128xf32>
    tpu.vector_store %arg3[%c0_13, %c0_14], %44 {strides = array<i32>} : memref<8x128xf32, #tpu.memory_space<vmem>>, vector<8x128xf32>,
    return
  }
  func.func @transform_0(%arg0: i32) -> (i32, i32) {
    %c0_i32 = arith.constant 0 : i32
    %c0_i32_0 = arith.constant 0 : i32
    return %arg0, %c0_i32 : i32, i32
  }
  func.func @transform_1(%arg0: i32) -> (i32, i32) {
    %c0_i32 = arith.constant 0 : i32
    %c0_i32_0 = arith.constant 0 : i32
    return %arg0, %c0_i32 : i32, i32
  }
  func.func @transform_2(%arg0: i32) -> (i32, i32) {
    %c0_i32 = arith.constant 0 : i32
    %c0_i32_0 = arith.constant 0 : i32
    return %arg0, %c0_i32 : i32, i32
  }
}

</mosaic_0001>

<llo_original>
// kernel: tpu_custom_call.1
$region0: #{tpu_custom_call.1}
  #allocation0 [shape = 'u32[]', space=smem, size = 0x4, offset = 0x4, fixed_abs, tag = 'smem constant byte address 0x4 - core index']
  #allocation1 [shape = 'u32[144,128]{1,0:T(1,128)}', space=vmem, size = 0x12000, scoped, tag = 'internal scratch']
  %s0 = inlined_call_operand.hbm [shape: f32[4,128], index: 0, kind: input, shape index: {}]
  %s1 = inlined_call_operand.vmem [shape: bf16[4,128], index: 1, kind: input, shape index: {}]
  %s2 = inlined_call_operand.hbm [shape: f32[8,128], index: 2, kind: output, shape index: {}]
  %s3 = sld [smem:[#allocation0]]
  $region22: #{tpu_custom_call.1} parent=0
    _
  %s5 = ssub.s32 1, %s3
  %s6 = scalar_select 0, %s5, %s3
  $region1: #{tpu_custom_call.1} parent=0
    #allocation2 [shape = 'u8[2048]{0}', space=vmem, size = 0x800, scoped, tag = 'input window, operand 0, single buffered']
    #allocation3 [shape = 's32[1]{0}', space=sflag, size = 0x4, scoped, tag = 'scoped memory for tpu_custom_call.1']
    #allocation4 [shape = 's32[1]{0}', space=sflag, size = 0x4, scoped, tag = 'scoped memory for tpu_custom_call.1']
    #allocation5 [shape = 'u8[4096]{0}', space=vmem, size = 0x1000, scoped, tag = 'output window, operand 0, single buffered']
    %7 = vsyncpa [#allocation3], 0
    %8 = vsyncpa [#allocation4], 0
    // Predicated region
    $region2: #{tpu_custom_call.1} parent=1 // pred_check
      _
    $region3: #{tpu_custom_call.1} parent=1 // pred_check_branch
      %10 = sbr.rel (0) target = $region5
    $region4: #{tpu_custom_call.1} parent=1 // pred_region
      %s12 = ssub.s32 64, 64
      %13 = vsyncadd [#allocation3], %s12
      %s15 = sshll.u32 [#allocation2], 4
      %s16 = int_to_ptr.vmem [resolvable:$true] %s15
      %18 = dma.hbm_to_vmem [thread:$0]  %s0, 64, %s16, [#allocation3]
    $region5: #{tpu_custom_call.1} parent=1 // pred_fallthru
      _
    // Predicated region
    $region6: #{tpu_custom_call.1} parent=1 // pred_check
      _
    $region7: #{tpu_custom_call.1} parent=1 // pred_check_branch
      %20 = sbr.rel (0) target = $region9
    $region8: #{tpu_custom_call.1} parent=1 // pred_region
      _
    $region9: #{tpu_custom_call.1} parent=1 // pred_fallthru
      _
    // Predicated region
    $region10: #{tpu_custom_call.1} parent=1 // pred_check
      _
    $region11: #{tpu_custom_call.1} parent=1 // pred_check_branch
      %22 = sbr.rel (0) target = $region13
    $region12: #{tpu_custom_call.1} parent=1 // pred_region
      %23 = dma.done [#allocation3], 64
    $region13: #{tpu_custom_call.1} parent=1 // pred_fallthru
      _
    %v24 = vld [vmem:[#allocation2] sm:$0xf]
    %v25 = vld [vmem:[%s1] sm:$0x3]
    %v26 = vunpack.c.l.bf16 %v25
    %v27 = vand.u32 2147483647, %v24
    %v28 = vsub.f32 0.0, %v27
    %v29 = vmul.f32 %v28, 1.442695
    %v30 = vpow.pop %v29
    %v31 = vsub.f32 1.0, %v26
    %v32 = vmul.f32 %v24, %v31
    %v33 = vsub.f32 0.0, %v24
    %v34 = vmax.f32 %v33, 0.0
    %v35 = vadd.f32 %v32, %v34
    %v36 = vadd.f32 %v30, 1.0
    %v37 = vlog2.pop %v36
    %v38 = vmul.f32 %v37, 0.6931472
    %v39 = vmul.f32 -0.5, %v30
    %v40 = vadd.f32 %v39, 1.0
    %v41 = vmul.f32 %v40, %v30
    %v42 = vand.u32 2147483647, %v30
    %vm43 = vcmp.lt.f32.partialorder %v42, 0.0004427343
    %v44 = vsel %vm43, %v41, %v38
    %v45 = vadd.f32 %v35, %v44
    %v46 = vmul.f32 %v26, 2.0
    %v47 = vsub.f32 1.0, %v46
    %v48 = vmul.f32 %v24, %v47
    %v49 = vadd.f32 %v30, 1.0
    %v50 = vrcp.pop %v49
    %vm51 = vcmp.ge.f32.partialorder %v48, 0.0
    %v52 = vmul.f32 %v30, %v50
    %v53 = vsel %vm51, %v50, %v52
    %v54 = vmul.f32 %v53, %v53
    %v55 = vmul.f32 %v54, %v45
    %v56 = vlaneseq
    %v57 = vshrl.u32 %v56, 7
    %vm58 = vcmp.eq.s32.totalorder %v57, 0
    %v59 = vlaneseq
    %v60 = vand.u32 %v59, 127
    %vm61 = vcmp.eq.s32.totalorder %v60, 0
    %vm62 = vmand %vm58, %vm61
    %vm63 = vcmask 1043456
    %v64 = vsel %vm63, %v55, 0.0
    %65 = vadd.xlane.f32.xlu0 %v64
    %v66 = vpop.xlane.xlu0 %65
    %v67 = vrot.slane %v66, 4
    %v68 = vadd.f32 %v66, %v67
    %v69 = vrot.slane %v68, 2
    %v70 = vadd.f32 %v68, %v69
    %v71 = vrot.slane %v70, 1
    %v72 = vadd.f32 %v70, %v71
    %s73 = vtos %v72
    %v74 = vstv %s73
    %v75 = vsel %vm62, %v74, 0.0
    %76 = vst [vmem:[#allocation5] sm:$0xff] %v75
    // Predicated region
    $region14: #{tpu_custom_call.1} parent=1 // pred_check
      _
    $region15: #{tpu_custom_call.1} parent=1 // pred_check_branch
      %78 = sbr.rel (0) target = $region17
    $region16: #{tpu_custom_call.1} parent=1 // pred_region
      %s80 = ssub.s32 128, 128
      %81 = vsyncadd [#allocation4], %s80
      %s83 = sshll.u32 [#allocation5], 4
      %s84 = int_to_ptr.vmem [resolvable:$true] %s83
      %86 = dma.vmem_to_hbm [thread:$0]  %s84, 128, %s2, [#allocation4]
    $region17: #{tpu_custom_call.1} parent=1 // pred_fallthru
      _
    // Predicated region
    $region18: #{tpu_custom_call.1} parent=1 // pred_check
      _
    $region19: #{tpu_custom_call.1} parent=1 // pred_check_branch
      %88 = sbr.rel (0) target = $region21
    $region20: #{tpu_custom_call.1} parent=1 // pred_region
      %89 = dma.done [#allocation4], 128
    $region21: #{tpu_custom_call.1} parent=1 // pred_fallthru
      _
    %90 = vsyncpa [#allocation3], 1
    %91 = vsyncpa [#allocation4], 1

</llo_original>
